<compile_context>
chip_gen: v5e
topology: v5e:2x2
jax: 0.10.0
libtpu: 0.0.40
codegen_flags: <defaults>
</compile_context>

<pallas_src>
import functools

import jax
import jax.numpy as jnp
from jax import lax
from jax.experimental import pallas as pl
from jax.experimental.pallas import tpu as pltpu

_LANE = 128
_MAX_SEGMENTS = 64  # bound on per-step unrolled lane segments (trace size)


def _gap_kernel(x_ref, o_ref, acc_ref, *, hw, blk, seg, inv_hw):
    """Row-wise mean over the flattened-HW axis, streamed in (R, blk) tiles.

    x_ref:   (R, blk)  current HW-chunk of R (n, c) rows (VMEM, auto-pipelined)
    o_ref:   (R, 1)    per-row mean, written on the last HW step
    acc_ref: (R, 1)    f32 running sum (VMEM scratch, persists over HW steps)
    """
    k = pl.program_id(1)

    @pl.when(k == 0)
    def _():
        acc_ref[...] = jnp.zeros_like(acc_ref)

    need_mask = (hw % blk) != 0  # static: only when blk doesn't cover HW evenly
    rows = x_ref.shape[0]
    base = k * blk

    part = jnp.zeros((rows, 1), jnp.float32)
    for s0 in range(0, blk, seg):
        w = min(seg, blk - s0)  # static segment width
        xs = x_ref[:, s0:s0 + w].astype(jnp.float32)  # bounded f32 temp
        if need_mask:
            lane = lax.broadcasted_iota(jnp.int32, xs.shape, 1)
            xs = jnp.where(lane + (base + s0) < hw, xs, 0.0)
        part = part + jnp.sum(xs, axis=-1, keepdims=True)
    acc_ref[...] += part

    @pl.when(k == pl.num_programs(1) - 1)
    def _():
        o_ref[...] = (acc_ref[...] * inv_hw).astype(o_ref.dtype)


def _vmem_capacity_bytes():
    """Physical VMEM per TensorCore; conservative default if query fails."""
    try:
        info = pltpu.get_tpu_info()
        cap = int(getattr(info, "vmem_capacity_bytes", 0))
        if cap > 0:
            return cap
    except Exception:
        pass
    return 64 * 1024 * 1024  # smallest current generation (v7x per-core)


def _choose_tiles(nc, hw, itemsize):
    """Pick (rows_per_block, hw_block, segment_width, vmem_limit_bytes)."""
    cap = _vmem_capacity_bytes()
    # Input-tile budget per grid step (double-buffered by the pipeline):
    #   v7x (64 MiB VMEM) -> 8 MiB tile; v5e/v6e (128 MiB) -> 16 MiB tile.
    tile_budget = min(16 << 20, max(4 << 20, cap // 8))

    # Rows per block: at least one full sublane group for the packed dtype
    # (8 f32 / 16 bf16 / 32 int8); grown while a full (r, HW) slab fits the
    # budget, but capped at nc//2 so the "parallel" row axis keeps >= 2 blocks
    # for megacore sharding even at batch size 1.
    r_min = min(nc, 8 * max(1, 4 // max(1, itemsize)))
    r = r_min
    if nc > r_min:
        fit = max(1, tile_budget // max(1, hw * itemsize))
        target = min(fit, max(r_min, nc // 2))
        r = max(r_min, (target // r_min) * r_min)
        r = min(r, nc)

    # HW block: largest multiple of 128 lanes within the budget.
    budget_blk = max(_LANE, (tile_budget // max(1, r * itemsize)) // _LANE * _LANE)
    if hw % _LANE == 0:
        blk = min(hw, budget_blk)
    elif budget_blk >= hw:
        blk = hw          # full row in one step (full-dim block: no 128 rule)
    else:
        blk = budget_blk  # ragged tail masked inside the kernel

    # Segment width: bounds per-step temporaries while keeping the unrolled
    # segment count <= _MAX_SEGMENTS.
    seg = min(blk, _LANE * max(1, pl.cdiv(blk, _MAX_SEGMENTS * _LANE)))

    # Scoped-VMEM limit: 2x double-buffered input tile + scratch/temp slack.
    tile_bytes = r * blk * itemsize
    vmem_limit = min(max(2 * tile_bytes + (8 << 20), 32 << 20), cap * 3 // 4)
    return r, blk, seg, int(vmem_limit)


def global_avg_pool(x, flatten=False):
    """GlobalAvgPool.forward for NCHW input x (Pallas TPU)."""
    N, C, H, W = x.shape
    HW = H * W
    NC = N * C
    x2 = x.reshape(NC, HW)  # free, contiguous reshape (no HBM copy)

    r, blk, seg, vmem_limit = _choose_tiles(NC, HW, x.dtype.itemsize)
    grid = (pl.cdiv(NC, r), pl.cdiv(HW, blk))

    kern = functools.partial(_gap_kernel, hw=HW, blk=blk, seg=seg,
                             inv_hw=1.0 / float(HW))

    out = pl.pallas_call(
        kern,
        out_shape=jax.ShapeDtypeStruct((NC, 1), x.dtype),
        grid=grid,
        in_specs=[pl.BlockSpec((r, blk), lambda i, k: (i, k))],
        out_specs=pl.BlockSpec((r, 1), lambda i, k: (i, 0)),
        scratch_shapes=[pltpu.VMEM((r, 1), jnp.float32)],
        compiler_params=pltpu.CompilerParams(
            dimension_semantics=("parallel", "arbitrary"),
            vmem_limit_bytes=vmem_limit),
    )(x2)

    if flatten:
        return out.reshape(N, C)
    return out.reshape(N, C, 1, 1)


if __name__ == "__main__":
    key = jax.random.PRNGKey(0)
    N, C, H, W = 2, 4, 16, 16
    x = jax.random.normal(key, (N, C, H, W), jnp.float32)

    y = jax.block_until_ready(global_avg_pool(x, flatten=False))
    y_flat = jax.block_until_ready(global_avg_pool(x, flatten=True))

    ref = jnp.mean(x.reshape(N, C, -1), axis=-1)
    assert y.shape == (N, C, 1, 1), y.shape
    assert y_flat.shape == (N, C), y_flat.shape
    assert bool(jnp.all(jnp.isfinite(y)))
    assert bool(jnp.allclose(y.reshape(N, C), ref, atol=1e-5, rtol=1e-5))
    assert bool(jnp.allclose(y_flat, ref, atol=1e-5, rtol=1e-5))
    print("KERNEL_OK")
</pallas_src>

<mosaic_0001>
module attributes {stable_mosaic.version = 11 : i64} {
  func.func @_gap_kernel(%arg0: i32, %arg1: i32, %arg2: memref<8x256xf32, #tpu.memory_space<vmem>>, %arg3: memref<8x1xf32, #tpu.memory_space<vmem>>, %arg4: memref<8x1xf32, #tpu.memory_space<vmem>>) attributes {dimension_semantics = [#tpu.dimension_semantics<parallel>, #tpu.dimension_semantics<arbitrary>], iteration_bounds = array<i64: 1, 1>, scalar_prefetch = 0 : i64, scratch_operands = 1 : i64, tpu.core_type = #tpu.core_type<tc>, window_params = [{transform_indices = @transform_0, window_bounds = array<i64: 8, 256>}, {transform_indices = @transform_1, window_bounds = array<i64: 8, 1>}]} {
    %c0_i32 = arith.constant 0 : i32
    %0 = arith.cmpi eq, %arg1, %c0_i32 : i32
    %1 = arith.extui %0 : i1 to i32
    %c0_i32_0 = arith.constant 0 : i32
    %2 = arith.cmpi ne, %1, %c0_i32_0 : i32
    scf.if %2 {
      %cst_11 = arith.constant 0.000000e+00 : f32
      %18 = vector.broadcast %cst_11 : f32 to vector<8x1xf32>
      %c0_12 = arith.constant 0 : index
      %c0_13 = arith.constant 0 : index
      %19 = vector.load %arg4[%c0_12, %c0_13] : memref<8x1xf32, #tpu.memory_space<vmem>>, vector<8x1xf32>
      tpu.vector_store %arg4[%c0_12, %c0_13], %18 {strides = array<i32>} : memref<8x1xf32, #tpu.memory_space<vmem>>, vector<8x1xf32>,
    } else {
    }
    %cst = arith.constant 0.000000e+00 : f32
    %3 = vector.broadcast %cst : f32 to vector<8x1xf32>
    %c0 = arith.constant 0 : index
    %c0_1 = arith.constant 0 : index
    %4 = vector.load %arg2[%c0, %c0_1] : memref<8x256xf32, #tpu.memory_space<vmem>>, vector<8x128xf32>
    %cst_2 = arith.constant dense<0.000000e+00> : vector<8xf32>
    %5 = vector.multi_reduction <add>, %4, %cst_2 [1] : vector<8x128xf32> to vector<8xf32>
    %6 = vector.shape_cast %5 : vector<8xf32> to vector<8x1xf32>
    %7 = arith.addf %3, %6 : vector<8x1xf32>
    %c0_3 = arith.constant 0 : index
    %c128 = arith.constant 128 : index
    %8 = vector.load %arg2[%c0_3, %c128] : memref<8x256xf32, #tpu.memory_space<vmem>>, vector<8x128xf32>
    %cst_4 = arith.constant dense<0.000000e+00> : vector<8xf32>
    %9 = vector.multi_reduction <add>, %8, %cst_4 [1] : vector<8x128xf32> to vector<8xf32>
    %10 = vector.shape_cast %9 : vector<8xf32> to vector<8x1xf32>
    %11 = arith.addf %7, %10 : vector<8x1xf32>
    %c0_5 = arith.constant 0 : index
    %c0_6 = arith.constant 0 : index
    %12 = vector.load %arg4[%c0_5, %c0_6] : memref<8x1xf32, #tpu.memory_space<vmem>>, vector<8x1xf32>
    %13 = arith.addf %12, %11 : vector<8x1xf32>
    %c0_7 = arith.constant 0 : index
    %c0_8 = arith.constant 0 : index
    %14 = vector.load %arg4[%c0_7, %c0_8] : memref<8x1xf32, #tpu.memory_space<vmem>>, vector<8x1xf32>
    tpu.vector_store %arg4[%c0_7, %c0_8], %13 {strides = array<i32>} : memref<8x1xf32, #tpu.memory_space<vmem>>, vector<8x1xf32>,
    %c0_i32_9 = arith.constant 0 : i32
    %15 = arith.cmpi eq, %arg1, %c0_i32_9 : i32
    %16 = arith.extui %15 : i1 to i32
    %c0_i32_10 = arith.constant 0 : i32
    %17 = arith.cmpi ne, %16, %c0_i32_10 : i32
    scf.if %17 {
      %c0_11 = arith.constant 0 : index
      %c0_12 = arith.constant 0 : index
      %18 = vector.load %arg4[%c0_11, %c0_12] : memref<8x1xf32, #tpu.memory_space<vmem>>, vector<8x1xf32>
      %cst_13 = arith.constant 3.906250e-03 : f32
      %19 = vector.broadcast %cst_13 : f32 to vector<8x1xf32>
      %20 = arith.mulf %18, %19 : vector<8x1xf32>
      %c0_14 = arith.constant 0 : index
      %c0_15 = arith.constant 0 : index
      %21 = vector.load %arg3[%c0_14, %c0_15] : memref<8x1xf32, #tpu.memory_space<vmem>>, vector<8x1xf32>
      tpu.vector_store %arg3[%c0_14, %c0_15], %20 {strides = array<i32>} : memref<8x1xf32, #tpu.memory_space<vmem>>, vector<8x1xf32>,
    } else {
    }
    return
  }
  func.func @transform_0(%arg0: i32, %arg1: i32) -> (i32, i32) {
    %c0_i32 = arith.constant 0 : i32
    return %arg0, %arg1 : i32, i32
  }
  func.func @transform_1(%arg0: i32, %arg1: i32) -> (i32, i32) {
    %c0_i32 = arith.constant 0 : i32
    %c0_i32_0 = arith.constant 0 : i32
    return %arg0, %c0_i32 : i32, i32
  }
}

</mosaic_0001>

<llo_original>
// kernel: tpu_custom_call.1
$region0: #{tpu_custom_call.1}
  #allocation0 [shape = 'u32[]', space=smem, size = 0x4, offset = 0x4, fixed_abs, tag = 'smem constant byte address 0x4 - core index']
  #allocation1 [shape = 'u32[72,128]{1,0:T(1,128)}', space=vmem, size = 0x9000, scoped, tag = 'internal scratch']
  #allocation2 [shape = 'f32[8,1]{1,0:T(8,128)}', space=vmem, size = 0x1000, scoped, tag = 'scratch operand']
  %s0 = inlined_call_operand.hbm [shape: f32[8,256], index: 0, kind: input, shape index: {}]
  %s1 = inlined_call_operand.vmem [shape: f32[8,1], index: 1, kind: output, shape index: {}]
  %s2 = sld [smem:[#allocation0]]
  $region26: #{tpu_custom_call.1} parent=0
    _
  %s4 = ssub.s32 1, %s2
  %s5 = scalar_select 0, %s4, %s2
  $region1: #{tpu_custom_call.1} parent=0
    #allocation3 [shape = 'u8[8192]{0}', space=vmem, size = 0x2000, scoped, tag = 'input window, operand 0, single buffered']
    #allocation4 [shape = 's32[1]{0}', space=sflag, size = 0x4, scoped, tag = 'scoped memory for tpu_custom_call.1']
    %6 = vsyncpa [#allocation4], 0
    // Predicated region
    $region2: #{tpu_custom_call.1} parent=1 // pred_check
      _
    $region3: #{tpu_custom_call.1} parent=1 // pred_check_branch
      %8 = sbr.rel (0) target = $region5
    $region4: #{tpu_custom_call.1} parent=1 // pred_region
      %10 = vsyncadd [#allocation4], 0
      %s12 = sshll.u32 %s0, 4
      %s13 = int_to_ptr.hbm [resolvable:$true] %s12
      %s14 = sshll.u32 [#allocation3], 4
      %s15 = int_to_ptr.vmem [resolvable:$true] %s14
      %17 = dma.hbm_to_vmem [thread:$0]  %s13, 256, %s15, [#allocation4]
    $region5: #{tpu_custom_call.1} parent=1 // pred_fallthru
      _
    // Predicated region
    $region6: #{tpu_custom_call.1} parent=1 // pred_check
      _
    $region7: #{tpu_custom_call.1} parent=1 // pred_check_branch
      %19 = sbr.rel (0) target = $region9
    $region8: #{tpu_custom_call.1} parent=1 // pred_region
      %21 = dma.done [#allocation4], 256
    $region9: #{tpu_custom_call.1} parent=1 // pred_fallthru
      _
    %p22 = scmp.eq.s32.totalorder 0, 0
    // Predicated region
    $region10: #{tpu_custom_call.1} parent=1 // pred_check
      %p23 = pneg %p22
    $region11: #{tpu_custom_call.1} parent=1 // pred_check_branch
      %25 = sbr.rel (%p23) target = $region13
    $region12: #{tpu_custom_call.1} parent=1 // pred_region
      %vm26 = vcmask 7168
      %27 = vst.msk [vmem:[#allocation2] sm:$0xff] %vm26, 0.0
    $region13: #{tpu_custom_call.1} parent=1 // pred_fallthru
      _
    %v28 = vld [vmem:[#allocation3] sm:$0xff]
    %29 = vadd.xlane.f32.xlu0 %v28
    %v30 = vpop.xlane.xlu0 %29
    %v31 = vadd.f32 %v30, 0.0
    %v32 = vld [vmem:[#allocation3 + $0x8] sm:$0xff]
    %33 = vadd.xlane.f32.xlu0 %v32
    %v34 = vpop.xlane.xlu0 %33
    %v35 = vadd.f32 %v31, %v34
    %v36 = vld [vmem:[#allocation2] sm:$0xff]
    %v37 = vadd.f32 %v36, %v35
    %vm38 = vcmask 7168
    %39 = vst.msk [vmem:[#allocation2] sm:$0xff] %vm38, %v37
    // Predicated region
    $region14: #{tpu_custom_call.1} parent=1 // pred_check
      %p40 = pneg %p22
    $region15: #{tpu_custom_call.1} parent=1 // pred_check_branch
      %42 = sbr.rel (%p40) target = $region17
    $region16: #{tpu_custom_call.1} parent=1 // pred_region
      %v43 = vld [vmem:[#allocation2] sm:$0xff]
      %v44 = vmul.f32 %v43, 0.00390625
      %45 = vst.msk [vmem:[%s1] sm:$0xff] %vm38, %v44
    $region17: #{tpu_custom_call.1} parent=1 // pred_fallthru
      _
    // Predicated region
    $region18: #{tpu_custom_call.1} parent=1 // pred_check
      _
    $region19: #{tpu_custom_call.1} parent=1 // pred_check_branch
      %47 = sbr.rel (0) target = $region21
    $region20: #{tpu_custom_call.1} parent=1 // pred_region
      _
    $region21: #{tpu_custom_call.1} parent=1 // pred_fallthru
      _
    // Predicated region
    $region22: #{tpu_custom_call.1} parent=1 // pred_check
      _
    $region23: #{tpu_custom_call.1} parent=1 // pred_check_branch
      %49 = sbr.rel (0) target = $region25
    $region24: #{tpu_custom_call.1} parent=1 // pred_region
      _
    $region25: #{tpu_custom_call.1} parent=1 // pred_fallthru
      _
    %50 = vsyncpa [#allocation4], 1

</llo_original>
